<compile_context>
chip_gen: v7x
topology: tpu7x:2x2x1
jax: 0.10.0
libtpu: 0.0.40
codegen_flags: <defaults>
</compile_context>

<pallas_src>
import jax
import jax.numpy as jnp
from jax import lax
from jax.experimental import pallas as pl
from jax.experimental.pallas import tpu as pltpu


def _conv_mm_kernel(xcol_ref, w_ref, b_ref, o_ref):
    """One fused matmul per block:  O = W @ Xcol + b.

    xcol_ref : (K*C_in, n_tile)   im2col'd input columns (lane axis = B*L tile)
    w_ref    : (C_out, K*C_in)    flattened conv weights (row layout k*C_in+ci)
    b_ref    : (C_out, 1)         bias
    o_ref    : (C_out, n_tile)    output tile
    """
    acc = jnp.dot(w_ref[...], xcol_ref[...], preferred_element_type=jnp.float32)
    o_ref[...] = (acc + b_ref[...]).astype(o_ref.dtype)


def standard_conv(x, weight, bias, *, n_adj=4, dilation=1):
    """Equivalent of StandardConv.forward(_input).

    x      : (B, C_in, L)        float32
    weight : (C_out, C_in, K)    with K = 2*n_adj + 1
    bias   : (C_out,)
    returns: (B, C_out, L)
    """
    if n_adj == 0:
        # PyTorch forward returns None when n_adj == 0.
        return None

    B, C_in, L = x.shape
    C_out, C_in_w, K = weight.shape
    assert C_in_w == C_in and K == 2 * n_adj + 1
    pad = n_adj * dilation

    # ---- glue (plain JAX, done once per call) -------------------------------
    x_pad = jnp.pad(x, ((0, 0), (0, 0), (pad, pad)))         # (B, C_in, L+2*pad)

    # im2col: shifted tap stack built once in the wrapper (not per-matmul inside
    # the kernel). Columns index (b, l); rows index (k, ci).
    taps = [x_pad[:, :, k * dilation: k * dilation + L] for k in range(K)]
    xcol = jnp.stack(taps, axis=0)                            # (K, B, C_in, L)
    xcol = jnp.transpose(xcol, (0, 2, 1, 3))                  # (K, C_in, B, L)
    KC = K * C_in
    N = B * L
    xcol = xcol.reshape(KC, N)                                # (K*C_in, B*L)

    # weight: (C_out, C_in, K) -> (C_out, K, C_in) -> (C_out, K*C_in)
    # (row layout matches xcol row layout: index = k*C_in + ci)
    w2d = jnp.transpose(weight, (0, 2, 1)).reshape(C_out, KC)
    b2d = bias.reshape(C_out, 1)

    # ---- lane tiling of the fused B*L axis ----------------------------------
    # Always pad the lane axis to a multiple of 128 -> unmasked lane-dense
    # stores. Small problems: one full-extent block.  Large problems: 1024-wide
    # tiles (per-block VMEM ~ (KC + C_out) * 1024 * 4 bytes, tiny), grid axis
    # "parallel" for megacore sharding.
    LANE = 128
    MAX_TILE = 1024
    n_128 = pl.cdiv(N, LANE) * LANE
    if n_128 <= MAX_TILE:
        n_tile = n_128
        N_pad = n_128
    else:
        n_tile = MAX_TILE
        N_pad = pl.cdiv(N, MAX_TILE) * MAX_TILE
    if N_pad != N:
        xcol = jnp.pad(xcol, ((0, 0), (0, N_pad - N)))

    grid = (N_pad // n_tile,)
    cost = pl.CostEstimate(
        flops=2 * C_out * KC * N_pad,
        transcendentals=0,
        bytes_accessed=4 * (KC * N_pad + C_out * KC + C_out + C_out * N_pad),
    )

    out2d = pl.pallas_call(
        _conv_mm_kernel,
        out_shape=jax.ShapeDtypeStruct((C_out, N_pad), x.dtype),
        grid=grid,
        in_specs=[
            pl.BlockSpec((KC, n_tile), lambda j: (0, j)),
            pl.BlockSpec((C_out, KC), lambda j: (0, 0)),
            pl.BlockSpec((C_out, 1), lambda j: (0, 0)),
        ],
        out_specs=pl.BlockSpec((C_out, n_tile), lambda j: (0, j)),
        compiler_params=pltpu.CompilerParams(
            dimension_semantics=("parallel",),
        ),
        cost_estimate=cost,
    )(xcol, w2d, b2d)

    # (C_out, B*L) -> (B, C_out, L)
    out = out2d[:, :N].reshape(C_out, B, L)
    return jnp.transpose(out, (1, 0, 2))


def _reference_conv(x, weight, bias, *, dilation, pad):
    """Pure-JAX reference (matches torch.nn.Conv1d semantics)."""
    out = lax.conv_general_dilated(
        x, weight,
        window_strides=(1,),
        padding=[(pad, pad)],
        rhs_dilation=(dilation,),
        dimension_numbers=("NCH", "OIH", "NCH"),
    )
    return out + bias[None, :, None]


if __name__ == "__main__":
    # Module hyperparameters (StandardConv(state_dim=4, out_state_dim=6)).
    state_dim = 4
    out_state_dim = 6
    n_adj = 4
    dilation = 1
    K = 2 * n_adj + 1

    B, L = 2, 16

    key = jax.random.PRNGKey(0)
    kx, kw, kb = jax.random.split(key, 3)
    x = jax.random.normal(kx, (B, state_dim, L), dtype=jnp.float32)
    # Deterministic synthetic parameter init (PyTorch Conv1d shapes).
    weight = jax.random.normal(kw, (out_state_dim, state_dim, K), dtype=jnp.float32) * 0.1
    bias = jax.random.normal(kb, (out_state_dim,), dtype=jnp.float32) * 0.1

    out = standard_conv(x, weight, bias, n_adj=n_adj, dilation=dilation)
    out = jax.block_until_ready(out)

    ref = _reference_conv(x, weight, bias, dilation=dilation, pad=n_adj * dilation)
    assert out.shape == (B, out_state_dim, L)
    assert jnp.allclose(out, ref, atol=1e-4, rtol=1e-4), "mismatch vs reference conv"

    print("KERNEL_OK")
</pallas_src>

<mosaic_0001>
module attributes {stable_mosaic.version = 11 : i64} {
  func.func @_conv_mm_kernel(%arg0: i32, %arg1: memref<36x128xf32, #tpu.memory_space<vmem>>, %arg2: memref<6x36xf32, #tpu.memory_space<vmem>>, %arg3: memref<6x1xf32, #tpu.memory_space<vmem>>, %arg4: memref<6x128xf32, #tpu.memory_space<vmem>>) attributes {dimension_semantics = [#tpu.dimension_semantics<parallel>], iteration_bounds = array<i64: 1>, scalar_prefetch = 0 : i64, scratch_operands = 0 : i64, tpu.core_type = #tpu.core_type<tc>, window_params = [{transform_indices = @transform_0, window_bounds = array<i64: 36, 128>}, {pipeline_mode = #tpu.pipeline_mode<synchronous>, transform_indices = @transform_1, window_bounds = array<i64: 6, 36>}, {pipeline_mode = #tpu.pipeline_mode<synchronous>, transform_indices = @transform_2, window_bounds = array<i64: 6, 1>}, {transform_indices = @transform_3, window_bounds = array<i64: 6, 128>}]} {
    %c0 = arith.constant 0 : index
    %c0_0 = arith.constant 0 : index
    %0 = vector.load %arg2[%c0, %c0_0] : memref<6x36xf32, #tpu.memory_space<vmem>>, vector<6x36xf32>
    %c0_1 = arith.constant 0 : index
    %c0_2 = arith.constant 0 : index
    %1 = vector.load %arg1[%c0_1, %c0_2] : memref<36x128xf32, #tpu.memory_space<vmem>>, vector<36x128xf32>
    %cst = arith.constant dense<0.000000e+00> : vector<6x128xf32>
    %2 = tpu.matmul %0, %1, %cst {dimension_numbers = #tpu.dot_dimension_numbers<[1], [0], [0], [1], [0, 0, 1, 1], [], []>} : vector<6x36xf32>, vector<36x128xf32>, vector<6x128xf32> -> vector<6x128xf32>
    %c0_3 = arith.constant 0 : index
    %c0_4 = arith.constant 0 : index
    %3 = vector.load %arg3[%c0_3, %c0_4] : memref<6x1xf32, #tpu.memory_space<vmem>>, vector<6x1xf32>
    %4 = vector.broadcast %3 : vector<6x1xf32> to vector<6x128xf32>
    %5 = arith.addf %2, %4 : vector<6x128xf32>
    %c0_5 = arith.constant 0 : index
    %c0_6 = arith.constant 0 : index
    %6 = vector.load %arg4[%c0_5, %c0_6] : memref<6x128xf32, #tpu.memory_space<vmem>>, vector<6x128xf32>
    tpu.vector_store %arg4[%c0_5, %c0_6], %5 {strides = array<i32>} : memref<6x128xf32, #tpu.memory_space<vmem>>, vector<6x128xf32>,
    return
  }
  func.func @transform_0(%arg0: i32) -> (i32, i32) {
    %c0_i32 = arith.constant 0 : i32
    %c0_i32_0 = arith.constant 0 : i32
    return %c0_i32, %arg0 : i32, i32
  }
  func.func @transform_1(%arg0: i32) -> (i32, i32) {
    %c0_i32 = arith.constant 0 : i32
    %c0_i32_0 = arith.constant 0 : i32
    %c0_i32_1 = arith.constant 0 : i32
    return %c0_i32, %c0_i32_0 : i32, i32
  }
  func.func @transform_2(%arg0: i32) -> (i32, i32) {
    %c0_i32 = arith.constant 0 : i32
    %c0_i32_0 = arith.constant 0 : i32
    %c0_i32_1 = arith.constant 0 : i32
    return %c0_i32, %c0_i32_0 : i32, i32
  }
  func.func @transform_3(%arg0: i32) -> (i32, i32) {
    %c0_i32 = arith.constant 0 : i32
    %c0_i32_0 = arith.constant 0 : i32
    return %c0_i32, %arg0 : i32, i32
  }
}

</mosaic_0001>

<llo_original>
// kernel: tpu_custom_call.1
$region0: #{tpu_custom_call.1}
  #allocation0 [shape = 'u32[]', space=smem, size = 0x4, offset = 0x4, fixed_abs, tag = 'smem constant byte address 0x4 - core index']
  #allocation1 [shape = 'u32[144,128]{1,0:T(1,128)}', space=vmem, size = 0x12000, scoped, tag = 'internal scratch']
  %s0 = inlined_call_operand.hbm [shape: f32[36,128], index: 0, kind: input, shape index: {}]
  %s1 = inlined_call_operand.vmem [shape: f32[6,36], index: 1, kind: input, shape index: {}]
  %s2 = inlined_call_operand.vmem [shape: f32[6,1], index: 2, kind: input, shape index: {}]
  %s3 = inlined_call_operand.hbm [shape: f32[6,128], index: 3, kind: output, shape index: {}]
  %s4 = sld [smem:[#allocation0]]
  $region26: #{tpu_custom_call.1} parent=0
    _
  %s6 = ssub.s32 1, %s4
  %s7 = scalar_select 0, %s6, %s4
  $region1: #{tpu_custom_call.1} parent=0
    #allocation2 [shape = 'u8[20480]{0}', space=vmem, size = 0x5000, scoped, tag = 'input window, operand 0, single buffered']
    #allocation3 [shape = 's32[1]{0}', space=sflag, size = 0x4, scoped, tag = 'scoped memory for tpu_custom_call.1']
    #allocation4 [shape = 's32[1]{0}', space=sflag, size = 0x4, scoped, tag = 'scoped memory for tpu_custom_call.1']
    #allocation5 [shape = 'u8[4096]{0}', space=vmem, size = 0x1000, scoped, tag = 'output window, operand 0, single buffered']
    %8 = vsyncpa [#allocation3], 0
    %9 = vsyncpa [#allocation4], 0
    // Predicated region
    $region2: #{tpu_custom_call.1} parent=1 // pred_check
      _
    $region3: #{tpu_custom_call.1} parent=1 // pred_check_branch
      %11 = sbr.rel (0) target = $region5
    $region4: #{tpu_custom_call.1} parent=1 // pred_region
      %s13 = ssub.s32 640, 640
      %14 = vsyncadd [#allocation3], %s13
      %s15 = sshll.u32 [#allocation2], 4
      %s16 = int_to_ptr.vmem [resolvable:$true] %s15
      %21 = dma.hbm_to_vmem [thread:$0]  %s0, 640, %s16, [#allocation3], 128, 128, 8
    $region5: #{tpu_custom_call.1} parent=1 // pred_fallthru
      _
    // Predicated region
    $region6: #{tpu_custom_call.1} parent=1 // pred_check
      _
    $region7: #{tpu_custom_call.1} parent=1 // pred_check_branch
      %23 = sbr.rel (0) target = $region9
    $region8: #{tpu_custom_call.1} parent=1 // pred_region
      _
    $region9: #{tpu_custom_call.1} parent=1 // pred_fallthru
      _
    // Predicated region
    $region10: #{tpu_custom_call.1} parent=1 // pred_check
      _
    $region11: #{tpu_custom_call.1} parent=1 // pred_check_branch
      %25 = sbr.rel (0) target = $region13
    $region12: #{tpu_custom_call.1} parent=1 // pred_region
      _
    $region13: #{tpu_custom_call.1} parent=1 // pred_fallthru
      _
    // Predicated region
    $region14: #{tpu_custom_call.1} parent=1 // pred_check
      _
    $region15: #{tpu_custom_call.1} parent=1 // pred_check_branch
      %27 = sbr.rel (0) target = $region17
    $region16: #{tpu_custom_call.1} parent=1 // pred_region
      %28 = dma.done [#allocation3], 640
    $region17: #{tpu_custom_call.1} parent=1 // pred_fallthru
      _
    %v29 = vld [vmem:[%s1] sm:$0x3f]
    %v30 = vld [vmem:[#allocation2] sm:$0xff]
    %v31 = vld [vmem:[#allocation2 + $0x8] sm:$0xff]
    %v32 = vld [vmem:[#allocation2 + $0x10] sm:$0xff]
    %v33 = vld [vmem:[#allocation2 + $0x18] sm:$0xff]
    %v34 = vld [vmem:[#allocation2 + $0x20] sm:$0xf]
    %v35 = vld [vmem:[%s2] sm:$0x3f]
    %37 = vset.pattern.permute.xlu0 0
    %38 = vperm.xlu0 %37, %v35
    %v39 = vpop.permute.xlu0 %38
    %vm41 = vcmask 293888
    %v43 = vsel %vm41, %v29, 0
    %vm45 = vcmask 1043456
    %v47 = vsel %vm45, %v34, 0
    %49 = vmatprep.subr.mxu0 0.0
    %50 = vmatpush1.msra.mxu0 %v30
    %51 = vmatprep.subr.mxu0 0.0
    %52 = vmatpush1.msra.mxu0 %v31
    %53 = vmatprep.subr.mxu0 0.0
    %54 = vmatpush1.msra.mxu0 %v32
    %55 = vmatprep.subr.mxu0 0.0
    %56 = vmatpush1.msra.mxu0 %v33
    %57 = vmatprep.subr.mxu0 0.0
    %58 = vmatpush1.msra.mxu0 %v47
    %59 = vmatprep.subr.mxu0 0.0
    %60 = vmatpush1.msra.mxu0 0.0
    %61 = vmatprep.subr.mxu0 0.0
    %62 = vmatpush1.msra.mxu0 0.0
    %63 = vmatprep.subr.mxu0 0.0
    %64 = vmatpush1.msra.mxu0 0.0
    %65 = vmatprep.subr.mxu0 0.0
    %66 = vmatpush1.msra.mxu0 0.0
    %67 = vmatprep.subr.mxu0 0.0
    %68 = vmatpush1.msra.mxu0 0.0
    %69 = vmatprep.subr.mxu0 0.0
    %70 = vmatpush1.msra.mxu0 0.0
    %71 = vmatprep.subr.mxu0 0.0
    %72 = vmatpush1.msra.mxu0 0.0
    %73 = vmatprep.subr.mxu0 0.0
    %74 = vmatpush1.msra.mxu0 0.0
    %75 = vmatprep.subr.mxu0 0.0
    %76 = vmatpush1.msra.mxu0 0.0
    %77 = vmatprep.subr.mxu0 0.0
    %78 = vmatpush1.msra.mxu0 0.0
    %79 = vmatprep.subr.mxu0 0.0
    %80 = vmatpush1.msra.mxu0 0.0
    %81 = vmatprep.subr.mxu0 0.0
    %82 = vmatpush1.msra.mxu0 0.0
    %83 = vmatprep.subr.mxu0 0.0
    %84 = vmatpush1.msra.mxu0 0.0
    %85 = vmatprep.subr.mxu0 0.0
    %86 = vmatpush1.msra.mxu0 0.0
    %87 = vmatprep.subr.mxu0 0.0
    %88 = vmatpush1.msra.mxu0 0.0
    %89 = vmatprep.subr.mxu0 0.0
    %90 = vmatpush1.msra.mxu0 0.0
    %91 = vmatprep.subr.mxu0 0.0
    %92 = vmatpush1.msra.mxu0 0.0
    %93 = vmatprep.subr.mxu0 0.0
    %94 = vmatpush1.msra.mxu0 0.0
    %95 = vmatprep.subr.mxu0 0.0
    %96 = vmatpush1.msra.mxu0 0.0
    %97 = vmatprep.subr.mxu0 0.0
    %98 = vmatpush1.msra.mxu0 0.0
    %99 = vmatprep.subr.mxu0 0.0
    %100 = vmatpush1.msra.mxu0 0.0
    %101 = vmatprep.subr.mxu0 0.0
    %102 = vmatpush1.msra.mxu0 0.0
    %103 = vmatprep.subr.mxu0 0.0
    %104 = vmatpush1.msra.mxu0 0.0
    %105 = vmatprep.subr.mxu0 0.0
    %106 = vmatpush1.msra.mxu0 0.0
    %107 = vmatprep.subr.mxu0 0.0
    %108 = vmatpush1.msra.mxu0 0.0
    %109 = vmatprep.subr.mxu0 0.0
    %110 = vmatpush1.msra.mxu0 0.0
    %111 = vmatprep.subr.mxu0 0.0
    %112 = vmatpush1.msra.mxu0 0.0
    %113 = vmatprep.mubr.f32.mxu0 0.0
    %114 = vmatmul.mubr.f32.gmra.mrb[0].mxu0 %v43
    %v115 = vpop.f32.mrb[0].mxu0
    %v116 = vadd.f32 %v39, %v115
    %v117 = vpop.f32.mrb[0].mxu0
    %118 = vdwg.mxu0
    %119 = vst [vmem:[#allocation5] sm:$0x3f] %v116
    // Predicated region
    $region18: #{tpu_custom_call.1} parent=1 // pred_check
      _
    $region19: #{tpu_custom_call.1} parent=1 // pred_check_branch
      %121 = sbr.rel (0) target = $region21
    $region20: #{tpu_custom_call.1} parent=1 // pred_region
      %s123 = ssub.s32 128, 128
      %124 = vsyncadd [#allocation4], %s123
      %s126 = sshll.u32 [#allocation5], 4
      %s127 = int_to_ptr.vmem [resolvable:$true] %s126
      %129 = dma.vmem_to_hbm [thread:$0]  %s127, 128, %s3, [#allocation4]
    $region21: #{tpu_custom_call.1} parent=1 // pred_fallthru
      _
    // Predicated region
    $region22: #{tpu_custom_call.1} parent=1 // pred_check
      _
    $region23: #{tpu_custom_call.1} parent=1 // pred_check_branch
      %131 = sbr.rel (0) target = $region25
    $region24: #{tpu_custom_call.1} parent=1 // pred_region
      %132 = dma.done [#allocation4], 128
    $region25: #{tpu_custom_call.1} parent=1 // pred_fallthru
      _
    %133 = vsyncpa [#allocation3], 1
    %134 = vsyncpa [#allocation4], 1

</llo_original>
